<compile_context>
chip_gen: v7x
topology: tpu7x:2x2x1
jax: 0.10.0
libtpu: 0.0.40
codegen_flags: <defaults>
</compile_context>

<pallas_src>
import functools

import jax
import jax.numpy as jnp
from jax.experimental import pallas as pl
from jax.experimental.pallas import tpu as pltpu

LANE = 128


def _scatter_linear_kernel(x_ref, w_ref, cs_ref, b_ref, o_ref, *,
                           num_groups, group_size, eps):
    # x_ref : (tb, F)  f32     w_ref : (F, Cp) bf16
    # cs_ref: (G, Cp)  f32     b_ref : (1, Cp) f32      o_ref: (tb, Cp) f32
    x = x_ref[...]                          # f32; used only for the group statistics
    x_bf = x.astype(jnp.bfloat16)           # single cast pass over F; feeds the MXU
    inv_n = 1.0 / group_size

    out = b_ref[...]                        # (1, Cp); broadcasts to (tb, Cp) on first add
    for g in range(num_groups):             # static unroll (num_groups is small)
        lo = g * group_size
        xs = x[:, lo:lo + group_size]       # (tb, gs) static lane-aligned view
        s1 = jnp.sum(xs, axis=-1, keepdims=True)
        s2 = jnp.sum(xs * xs, axis=-1, keepdims=True)        # shares the xs load with s1
        mean = s1 * inv_n
        var = jnp.maximum(s2 * inv_n - mean * mean, 0.0)     # one-pass var, clamped >= 0
        inv = jax.lax.rsqrt(var + eps)                       # EUP
        # MXU: raw per-group matmul; GroupNorm scale/shift applied on Cp=128 lanes only.
        partial = jnp.dot(x_bf[:, lo:lo + group_size], w_ref[lo:lo + group_size, :],
                          preferred_element_type=jnp.float32)
        out = out + inv * partial - (inv * mean) * cs_ref[g:g + 1, :]
    o_ref[...] = out.astype(o_ref.dtype)


def prepare_scatter_linear_params(weight, bias, *, num_groups=4, classes_padded=LANE):
    """One-time parameter prep (hoisted out of the per-call path).

    weight: (classes, in_features) PyTorch layout; bias: (classes,).
    Returns:
      wt_p: (in_features, classes_padded) bf16  — transposed, lane-padded weight
      cs_p: (num_groups, classes_padded)  f32   — per-group column sums of wt_p
      b_p : (1, classes_padded)           f32   — padded bias
    """
    classes, in_features = weight.shape
    assert classes <= classes_padded
    assert in_features % num_groups == 0
    wt = weight.T.astype(jnp.bfloat16)                              # (F, classes)
    wt_p = jnp.zeros((in_features, classes_padded), jnp.bfloat16).at[:, :classes].set(wt)
    # Per-group column sums of the bf16 weight: folds the GroupNorm mean-shift into the
    # 128-lane output instead of a full-width subtract over F.
    cs_p = jnp.sum(
        wt_p.astype(jnp.float32).reshape(num_groups, in_features // num_groups,
                                         classes_padded),
        axis=1)
    b_p = jnp.zeros((1, classes_padded), jnp.float32).at[0, :classes].set(
        bias.astype(jnp.float32))
    return wt_p, cs_p, b_p


def _choose_tiling(B, cap=512):
    """Pick (padded_B, tile_rows).

    tile_rows is a multiple of 8 (sublane aligned), capped at `cap` rows so a
    double-buffered (cap, F) f32 tile stays inside v5e's 16 MiB scoped-VMEM default,
    and we produce >= 2 grid steps whenever B > 8 so the 'parallel' batch axis can
    shard across v7x's two TensorCores.
    """
    b8 = max(8, pl.cdiv(B, 8) * 8)
    n_steps = max(2, pl.cdiv(b8, cap))
    tb = min(cap, max(8, pl.cdiv(pl.cdiv(b8, n_steps), 8) * 8))
    return pl.cdiv(b8, tb) * tb, tb


def scatter_linear(x, wt_p, cs_p, b_p, *, K, h, w, classes, num_groups=4, eps=1e-5):
    """x: (B, K, h, w) float32. wt_p/cs_p/b_p from prepare_scatter_linear_params."""
    B = x.shape[0]
    F = K * h * w
    Cp = wt_p.shape[1]
    assert K % num_groups == 0, "K must be divisible by num_groups"
    assert wt_p.shape[0] == F
    assert cs_p.shape == (num_groups, Cp) and b_p.shape == (1, Cp)
    group_size = F // num_groups

    x2 = x.reshape(B, F).astype(jnp.float32)      # flat, lane-dense activation
    Bp, tb = _choose_tiling(B)
    if Bp != B:
        # Zero rows: mean=0, var clamped >= 0 -> finite output; sliced away below.
        x2 = jnp.pad(x2, ((0, Bp - B), (0, 0)))

    kernel = functools.partial(_scatter_linear_kernel, num_groups=num_groups,
                               group_size=group_size, eps=eps)

    out_p = pl.pallas_call(
        kernel,
        out_shape=jax.ShapeDtypeStruct((Bp, Cp), jnp.float32),
        grid_spec=pltpu.PrefetchScalarGridSpec(
            num_scalar_prefetch=0,
            grid=(Bp // tb,),
            in_specs=[
                pl.BlockSpec((tb, F), lambda i: (i, 0)),
                pl.BlockSpec((F, Cp), lambda i: (0, 0)),           # weight: VMEM-resident
                pl.BlockSpec((num_groups, Cp), lambda i: (0, 0)),  # per-group colsum
                pl.BlockSpec((1, Cp), lambda i: (0, 0)),           # bias
            ],
            out_specs=pl.BlockSpec((tb, Cp), lambda i: (i, 0)),
        ),
        compiler_params=pltpu.CompilerParams(dimension_semantics=("parallel",)),
    )(x2, wt_p, cs_p, b_p)
    return out_p[:B, :classes]


def reference(x, weight, bias, *, K, h, w, num_groups=4, eps=1e-5):
    B = x.shape[0]
    xg = x.reshape(B, num_groups, -1)
    mean = jnp.mean(xg, axis=-1, keepdims=True)
    var = jnp.mean(jnp.square(xg - mean), axis=-1, keepdims=True)
    xn = ((xg - mean) / jnp.sqrt(var + eps)).reshape(B, K * h * w)
    return xn @ weight.T + bias


if __name__ == "__main__":
    # Module config: ScatterLinear(in_channels=4, hw_dims=(16, 16), classes=10, num_groups=4)
    K, h, w, classes, num_groups = 4, 16, 16, 10, 4
    B = 2
    in_features = K * h * w

    key = jax.random.PRNGKey(0)
    kx, kw, kb = jax.random.split(key, 3)
    x = jax.random.normal(kx, (B, K, h, w), dtype=jnp.float32)
    # Deterministic parameter init (uniform, like nn.Linear's default bound 1/sqrt(fan_in)).
    bound = 1.0 / (in_features ** 0.5)
    weight = jax.random.uniform(kw, (classes, in_features), jnp.float32, -bound, bound)
    bias = jax.random.uniform(kb, (classes,), jnp.float32, -bound, bound)

    # One-time parameter prep (pad classes to 128, transpose, bf16-cast, per-group colsums).
    wt_p, cs_p, b_p = prepare_scatter_linear_params(weight, bias, num_groups=num_groups)

    out = scatter_linear(x, wt_p, cs_p, b_p, K=K, h=h, w=w, classes=classes,
                         num_groups=num_groups)
    out = jax.block_until_ready(out)

    ref = reference(x, weight, bias, K=K, h=h, w=w, num_groups=num_groups)
    assert out.shape == (B, classes)
    # bf16 MXU inputs over a 1024-length contraction (fp32 accumulation) -> looser tolerance.
    assert jnp.allclose(out, ref, atol=3e-2, rtol=3e-2), float(jnp.max(jnp.abs(out - ref)))
    print("KERNEL_OK")
</pallas_src>

<mosaic_0001>
module attributes {stable_mosaic.version = 11 : i64} {
  func.func @_scatter_linear_kernel(%arg0: i32, %arg1: memref<8x1024xf32, #tpu.memory_space<vmem>>, %arg2: memref<1024x128xbf16, #tpu.memory_space<vmem>>, %arg3: memref<4x128xf32, #tpu.memory_space<vmem>>, %arg4: memref<1x128xf32, #tpu.memory_space<vmem>>, %arg5: memref<8x128xf32, #tpu.memory_space<vmem>>) attributes {dimension_semantics = [#tpu.dimension_semantics<parallel>], iteration_bounds = array<i64: 1>, scalar_prefetch = 0 : i64, scratch_operands = 0 : i64, tpu.core_type = #tpu.core_type<tc>, window_params = [{transform_indices = @transform_0, window_bounds = array<i64: 8, 1024>}, {pipeline_mode = #tpu.pipeline_mode<synchronous>, transform_indices = @transform_1, window_bounds = array<i64: 1024, 128>}, {pipeline_mode = #tpu.pipeline_mode<synchronous>, transform_indices = @transform_2, window_bounds = array<i64: 4, 128>}, {pipeline_mode = #tpu.pipeline_mode<synchronous>, transform_indices = @transform_3, window_bounds = array<i64: 1, 128>}, {transform_indices = @transform_4, window_bounds = array<i64: 8, 128>}]} {
    %c0 = arith.constant 0 : index
    %c0_0 = arith.constant 0 : index
    %0 = vector.load %arg1[%c0, %c0_0] : memref<8x1024xf32, #tpu.memory_space<vmem>>, vector<8x1024xf32>
    %1 = arith.truncf %0 : vector<8x1024xf32> to vector<8x1024xbf16>
    %c0_1 = arith.constant 0 : index
    %c0_2 = arith.constant 0 : index
    %2 = vector.load %arg4[%c0_1, %c0_2] : memref<1x128xf32, #tpu.memory_space<vmem>>, vector<1x128xf32>
    %3 = vector.extract_strided_slice %0 {offsets = [0, 0], sizes = [8, 256], strides = [1, 1]} : vector<8x1024xf32> to vector<8x256xf32>
    %cst = arith.constant dense<0.000000e+00> : vector<8xf32>
    %4 = vector.multi_reduction <add>, %3, %cst [1] : vector<8x256xf32> to vector<8xf32>
    %5 = vector.shape_cast %4 : vector<8xf32> to vector<8x1xf32>
    %6 = arith.mulf %3, %3 : vector<8x256xf32>
    %cst_3 = arith.constant dense<0.000000e+00> : vector<8xf32>
    %7 = vector.multi_reduction <add>, %6, %cst_3 [1] : vector<8x256xf32> to vector<8xf32>
    %8 = vector.shape_cast %7 : vector<8xf32> to vector<8x1xf32>
    %cst_4 = arith.constant 3.906250e-03 : f32
    %9 = vector.broadcast %cst_4 : f32 to vector<8x1xf32>
    %10 = arith.mulf %5, %9 : vector<8x1xf32>
    %cst_5 = arith.constant 3.906250e-03 : f32
    %11 = vector.broadcast %cst_5 : f32 to vector<8x1xf32>
    %12 = arith.mulf %8, %11 : vector<8x1xf32>
    %13 = arith.mulf %10, %10 : vector<8x1xf32>
    %14 = arith.subf %12, %13 : vector<8x1xf32>
    %cst_6 = arith.constant 0.000000e+00 : f32
    %15 = vector.broadcast %cst_6 : f32 to vector<8x1xf32>
    %16 = arith.maximumf %14, %15 : vector<8x1xf32>
    %cst_7 = arith.constant 9.99999974E-6 : f32
    %17 = vector.broadcast %cst_7 : f32 to vector<8x1xf32>
    %18 = arith.addf %16, %17 : vector<8x1xf32>
    %19 = math.rsqrt %18 : vector<8x1xf32>
    %20 = vector.extract_strided_slice %1 {offsets = [0, 0], sizes = [8, 256], strides = [1, 1]} : vector<8x1024xbf16> to vector<8x256xbf16>
    %c0_8 = arith.constant 0 : index
    %c0_9 = arith.constant 0 : index
    %21 = vector.load %arg2[%c0_8, %c0_9] : memref<1024x128xbf16, #tpu.memory_space<vmem>>, vector<256x128xbf16>
    %cst_10 = arith.constant dense<0.000000e+00> : vector<8x128xf32>
    %22 = tpu.matmul %20, %21, %cst_10 {dimension_numbers = #tpu.dot_dimension_numbers<[1], [0], [0], [1], [0, 0, 1, 1], [], []>} : vector<8x256xbf16>, vector<256x128xbf16>, vector<8x128xf32> -> vector<8x128xf32>
    %23 = vector.broadcast %19 : vector<8x1xf32> to vector<8x128xf32>
    %24 = arith.mulf %23, %22 : vector<8x128xf32>
    %25 = vector.broadcast %2 : vector<1x128xf32> to vector<8x128xf32>
    %26 = arith.addf %25, %24 : vector<8x128xf32>
    %27 = arith.mulf %19, %10 : vector<8x1xf32>
    %c0_11 = arith.constant 0 : index
    %c0_12 = arith.constant 0 : index
    %28 = vector.load %arg3[%c0_11, %c0_12] : memref<4x128xf32, #tpu.memory_space<vmem>>, vector<1x128xf32>
    %29 = vector.broadcast %27 : vector<8x1xf32> to vector<8x128xf32>
    %30 = vector.broadcast %28 : vector<1x128xf32> to vector<8x128xf32>
    %31 = arith.mulf %29, %30 : vector<8x128xf32>
    %32 = arith.subf %26, %31 : vector<8x128xf32>
    %33 = vector.extract_strided_slice %0 {offsets = [0, 256], sizes = [8, 256], strides = [1, 1]} : vector<8x1024xf32> to vector<8x256xf32>
    %cst_13 = arith.constant dense<0.000000e+00> : vector<8xf32>
    %34 = vector.multi_reduction <add>, %33, %cst_13 [1] : vector<8x256xf32> to vector<8xf32>
    %35 = vector.shape_cast %34 : vector<8xf32> to vector<8x1xf32>
    %36 = arith.mulf %33, %33 : vector<8x256xf32>
    %cst_14 = arith.constant dense<0.000000e+00> : vector<8xf32>
    %37 = vector.multi_reduction <add>, %36, %cst_14 [1] : vector<8x256xf32> to vector<8xf32>
    %38 = vector.shape_cast %37 : vector<8xf32> to vector<8x1xf32>
    %cst_15 = arith.constant 3.906250e-03 : f32
    %39 = vector.broadcast %cst_15 : f32 to vector<8x1xf32>
    %40 = arith.mulf %35, %39 : vector<8x1xf32>
    %cst_16 = arith.constant 3.906250e-03 : f32
    %41 = vector.broadcast %cst_16 : f32 to vector<8x1xf32>
    %42 = arith.mulf %38, %41 : vector<8x1xf32>
    %43 = arith.mulf %40, %40 : vector<8x1xf32>
    %44 = arith.subf %42, %43 : vector<8x1xf32>
    %cst_17 = arith.constant 0.000000e+00 : f32
    %45 = vector.broadcast %cst_17 : f32 to vector<8x1xf32>
    %46 = arith.maximumf %44, %45 : vector<8x1xf32>
    %cst_18 = arith.constant 9.99999974E-6 : f32
    %47 = vector.broadcast %cst_18 : f32 to vector<8x1xf32>
    %48 = arith.addf %46, %47 : vector<8x1xf32>
    %49 = math.rsqrt %48 : vector<8x1xf32>
    %50 = vector.extract_strided_slice %1 {offsets = [0, 256], sizes = [8, 256], strides = [1, 1]} : vector<8x1024xbf16> to vector<8x256xbf16>
    %c256 = arith.constant 256 : index
    %c0_19 = arith.constant 0 : index
    %51 = vector.load %arg2[%c256, %c0_19] : memref<1024x128xbf16, #tpu.memory_space<vmem>>, vector<256x128xbf16>
    %cst_20 = arith.constant dense<0.000000e+00> : vector<8x128xf32>
    %52 = tpu.matmul %50, %51, %cst_20 {dimension_numbers = #tpu.dot_dimension_numbers<[1], [0], [0], [1], [0, 0, 1, 1], [], []>} : vector<8x256xbf16>, vector<256x128xbf16>, vector<8x128xf32> -> vector<8x128xf32>
    %53 = vector.broadcast %49 : vector<8x1xf32> to vector<8x128xf32>
    %54 = arith.mulf %53, %52 : vector<8x128xf32>
    %55 = arith.addf %32, %54 : vector<8x128xf32>
    %56 = arith.mulf %49, %40 : vector<8x1xf32>
    %c1 = arith.constant 1 : index
    %c0_21 = arith.constant 0 : index
    %57 = vector.load %arg3[%c1, %c0_21] : memref<4x128xf32, #tpu.memory_space<vmem>>, vector<1x128xf32>
    %58 = vector.broadcast %56 : vector<8x1xf32> to vector<8x128xf32>
    %59 = vector.broadcast %57 : vector<1x128xf32> to vector<8x128xf32>
    %60 = arith.mulf %58, %59 : vector<8x128xf32>
    %61 = arith.subf %55, %60 : vector<8x128xf32>
    %62 = vector.extract_strided_slice %0 {offsets = [0, 512], sizes = [8, 256], strides = [1, 1]} : vector<8x1024xf32> to vector<8x256xf32>
    %cst_22 = arith.constant dense<0.000000e+00> : vector<8xf32>
    %63 = vector.multi_reduction <add>, %62, %cst_22 [1] : vector<8x256xf32> to vector<8xf32>
    %64 = vector.shape_cast %63 : vector<8xf32> to vector<8x1xf32>
    %65 = arith.mulf %62, %62 : vector<8x256xf32>
    %cst_23 = arith.constant dense<0.000000e+00> : vector<8xf32>
    %66 = vector.multi_reduction <add>, %65, %cst_23 [1] : vector<8x256xf32> to vector<8xf32>
    %67 = vector.shape_cast %66 : vector<8xf32> to vector<8x1xf32>
    %cst_24 = arith.constant 3.906250e-03 : f32
    %68 = vector.broadcast %cst_24 : f32 to vector<8x1xf32>
    %69 = arith.mulf %64, %68 : vector<8x1xf32>
    %cst_25 = arith.constant 3.906250e-03 : f32
    %70 = vector.broadcast %cst_25 : f32 to vector<8x1xf32>
    %71 = arith.mulf %67, %70 : vector<8x1xf32>
    %72 = arith.mulf %69, %69 : vector<8x1xf32>
    %73 = arith.subf %71, %72 : vector<8x1xf32>
    %cst_26 = arith.constant 0.000000e+00 : f32
    %74 = vector.broadcast %cst_26 : f32 to vector<8x1xf32>
    %75 = arith.maximumf %73, %74 : vector<8x1xf32>
    %cst_27 = arith.constant 9.99999974E-6 : f32
    %76 = vector.broadcast %cst_27 : f32 to vector<8x1xf32>
    %77 = arith.addf %75, %76 : vector<8x1xf32>
    %78 = math.rsqrt %77 : vector<8x1xf32>
    %79 = vector.extract_strided_slice %1 {offsets = [0, 512], sizes = [8, 256], strides = [1, 1]} : vector<8x1024xbf16> to vector<8x256xbf16>
    %c512 = arith.constant 512 : index
    %c0_28 = arith.constant 0 : index
    %80 = vector.load %arg2[%c512, %c0_28] : memref<1024x128xbf16, #tpu.memory_space<vmem>>, vector<256x128xbf16>
    %cst_29 = arith.constant dense<0.000000e+00> : vector<8x128xf32>
    %81 = tpu.matmul %79, %80, %cst_29 {dimension_numbers = #tpu.dot_dimension_numbers<[1], [0], [0], [1], [0, 0, 1, 1], [], []>} : vector<8x256xbf16>, vector<256x128xbf16>, vector<8x128xf32> -> vector<8x128xf32>
    %82 = vector.broadcast %78 : vector<8x1xf32> to vector<8x128xf32>
    %83 = arith.mulf %82, %81 : vector<8x128xf32>
    %84 = arith.addf %61, %83 : vector<8x128xf32>
    %85 = arith.mulf %78, %69 : vector<8x1xf32>
    %c2 = arith.constant 2 : index
    %c0_30 = arith.constant 0 : index
    %86 = vector.load %arg3[%c2, %c0_30] : memref<4x128xf32, #tpu.memory_space<vmem>>, vector<1x128xf32>
    %87 = vector.broadcast %85 : vector<8x1xf32> to vector<8x128xf32>
    %88 = vector.broadcast %86 : vector<1x128xf32> to vector<8x128xf32>
    %89 = arith.mulf %87, %88 : vector<8x128xf32>
    %90 = arith.subf %84, %89 : vector<8x128xf32>
    %91 = vector.extract_strided_slice %0 {offsets = [0, 768], sizes = [8, 256], strides = [1, 1]} : vector<8x1024xf32> to vector<8x256xf32>
    %cst_31 = arith.constant dense<0.000000e+00> : vector<8xf32>
    %92 = vector.multi_reduction <add>, %91, %cst_31 [1] : vector<8x256xf32> to vector<8xf32>
    %93 = vector.shape_cast %92 : vector<8xf32> to vector<8x1xf32>
    %94 = arith.mulf %91, %91 : vector<8x256xf32>
    %cst_32 = arith.constant dense<0.000000e+00> : vector<8xf32>
    %95 = vector.multi_reduction <add>, %94, %cst_32 [1] : vector<8x256xf32> to vector<8xf32>
    %96 = vector.shape_cast %95 : vector<8xf32> to vector<8x1xf32>
    %cst_33 = arith.constant 3.906250e-03 : f32
    %97 = vector.broadcast %cst_33 : f32 to vector<8x1xf32>
    %98 = arith.mulf %93, %97 : vector<8x1xf32>
    %cst_34 = arith.constant 3.906250e-03 : f32
    %99 = vector.broadcast %cst_34 : f32 to vector<8x1xf32>
    %100 = arith.mulf %96, %99 : vector<8x1xf32>
    %101 = arith.mulf %98, %98 : vector<8x1xf32>
    %102 = arith.subf %100, %101 : vector<8x1xf32>
    %cst_35 = arith.constant 0.000000e+00 : f32
    %103 = vector.broadcast %cst_35 : f32 to vector<8x1xf32>
    %104 = arith.maximumf %102, %103 : vector<8x1xf32>
    %cst_36 = arith.constant 9.99999974E-6 : f32
    %105 = vector.broadcast %cst_36 : f32 to vector<8x1xf32>
    %106 = arith.addf %104, %105 : vector<8x1xf32>
    %107 = math.rsqrt %106 : vector<8x1xf32>
    %108 = vector.extract_strided_slice %1 {offsets = [0, 768], sizes = [8, 256], strides = [1, 1]} : vector<8x1024xbf16> to vector<8x256xbf16>
    %c768 = arith.constant 768 : index
    %c0_37 = arith.constant 0 : index
    %109 = vector.load %arg2[%c768, %c0_37] : memref<1024x128xbf16, #tpu.memory_space<vmem>>, vector<256x128xbf16>
    %cst_38 = arith.constant dense<0.000000e+00> : vector<8x128xf32>
    %110 = tpu.matmul %108, %109, %cst_38 {dimension_numbers = #tpu.dot_dimension_numbers<[1], [0], [0], [1], [0, 0, 1, 1], [], []>} : vector<8x256xbf16>, vector<256x128xbf16>, vector<8x128xf32> -> vector<8x128xf32>
    %111 = vector.broadcast %107 : vector<8x1xf32> to vector<8x128xf32>
    %112 = arith.mulf %111, %110 : vector<8x128xf32>
    %113 = arith.addf %90, %112 : vector<8x128xf32>
    %114 = arith.mulf %107, %98 : vector<8x1xf32>
    %c3 = arith.constant 3 : index
    %c0_39 = arith.constant 0 : index
    %115 = vector.load %arg3[%c3, %c0_39] : memref<4x128xf32, #tpu.memory_space<vmem>>, vector<1x128xf32>
    %116 = vector.broadcast %114 : vector<8x1xf32> to vector<8x128xf32>
    %117 = vector.broadcast %115 : vector<1x128xf32> to vector<8x128xf32>
    %118 = arith.mulf %116, %117 : vector<8x128xf32>
    %119 = arith.subf %113, %118 : vector<8x128xf32>
    %c0_40 = arith.constant 0 : index
    %c0_41 = arith.constant 0 : index
    %120 = vector.load %arg5[%c0_40, %c0_41] : memref<8x128xf32, #tpu.memory_space<vmem>>, vector<8x128xf32>
    tpu.vector_store %arg5[%c0_40, %c0_41], %119 {strides = array<i32>} : memref<8x128xf32, #tpu.memory_space<vmem>>, vector<8x128xf32>,
    return
  }
  func.func @transform_0(%arg0: i32) -> (i32, i32) {
    %c0_i32 = arith.constant 0 : i32
    %c0_i32_0 = arith.constant 0 : i32
    return %arg0, %c0_i32 : i32, i32
  }
  func.func @transform_1(%arg0: i32) -> (i32, i32) {
    %c0_i32 = arith.constant 0 : i32
    %c0_i32_0 = arith.constant 0 : i32
    %c0_i32_1 = arith.constant 0 : i32
    return %c0_i32, %c0_i32_0 : i32, i32
  }
  func.func @transform_2(%arg0: i32) -> (i32, i32) {
    %c0_i32 = arith.constant 0 : i32
    %c0_i32_0 = arith.constant 0 : i32
    %c0_i32_1 = arith.constant 0 : i32
    return %c0_i32, %c0_i32_0 : i32, i32
  }
  func.func @transform_3(%arg0: i32) -> (i32, i32) {
    %c0_i32 = arith.constant 0 : i32
    %c0_i32_0 = arith.constant 0 : i32
    %c0_i32_1 = arith.constant 0 : i32
    return %c0_i32, %c0_i32_0 : i32, i32
  }
  func.func @transform_4(%arg0: i32) -> (i32, i32) {
    %c0_i32 = arith.constant 0 : i32
    %c0_i32_0 = arith.constant 0 : i32
    return %arg0, %c0_i32 : i32, i32
  }
}

</mosaic_0001>

<llo_original>
// kernel: tpu_custom_call.1
$region0: #{tpu_custom_call.1}
  #allocation0 [shape = 'u32[]', space=smem, size = 0x4, offset = 0x4, fixed_abs, tag = 'smem constant byte address 0x4 - core index']
  #allocation1 [shape = 'u32[144,128]{1,0:T(1,128)}', space=vmem, size = 0x12000, scoped, tag = 'internal scratch']
  %s0 = inlined_call_operand.hbm [shape: f32[8,1024], index: 0, kind: input, shape index: {}]
  %s1 = inlined_call_operand.hbm [shape: bf16[1024,128], index: 1, kind: input, shape index: {}]
  %s2 = inlined_call_operand.vmem [shape: f32[4,128], index: 2, kind: input, shape index: {}]
  %s3 = inlined_call_operand.vmem [shape: f32[1,128], index: 3, kind: input, shape index: {}]
  %s4 = inlined_call_operand.hbm [shape: f32[8,128], index: 4, kind: output, shape index: {}]
  %s5 = sld [smem:[#allocation0]]
  $region34: #{tpu_custom_call.1} parent=0
    _
  %s7 = ssub.s32 1, %s5
  %s8 = scalar_select 0, %s7, %s5
  $region1: #{tpu_custom_call.1} parent=0
    #allocation2 [shape = 'u8[32768]{0}', space=vmem, size = 0x8000, scoped, tag = 'input window, operand 0, single buffered']
    #allocation3 [shape = 's32[1]{0}', space=sflag, size = 0x4, scoped, tag = 'scoped memory for tpu_custom_call.1']
    #allocation4 [shape = 's32[1]{0}', space=sflag, size = 0x4, scoped, tag = 'scoped memory for tpu_custom_call.1']
    #allocation5 [shape = 'u8[262144]{0}', space=vmem, size = 0x40000, scoped, tag = 'input window, operand 1, single buffered']
    #allocation6 [shape = 's32[1]{0}', space=sflag, size = 0x4, scoped, tag = 'scoped memory for tpu_custom_call.1']
    #allocation7 [shape = 'u8[4096]{0}', space=vmem, size = 0x1000, scoped, tag = 'output window, operand 0, single buffered']
    %9 = vsyncpa [#allocation3], 0
    %10 = vsyncpa [#allocation6], 0
    %11 = vsyncpa [#allocation4], 0
    // Predicated region
    $region2: #{tpu_custom_call.1} parent=1 // pred_check
      _
    $region3: #{tpu_custom_call.1} parent=1 // pred_check_branch
      %13 = sbr.rel (0) target = $region5
    $region4: #{tpu_custom_call.1} parent=1 // pred_region
      %s15 = ssub.s32 1024, 1024
      %16 = vsyncadd [#allocation3], %s15
      %s18 = sshll.u32 [#allocation2], 4
      %s19 = int_to_ptr.vmem [resolvable:$true] %s18
      %21 = dma.hbm_to_vmem [thread:$0]  %s0, 1024, %s19, [#allocation3]
    $region5: #{tpu_custom_call.1} parent=1 // pred_fallthru
      _
    // Predicated region
    $region6: #{tpu_custom_call.1} parent=1 // pred_check
      _
    $region7: #{tpu_custom_call.1} parent=1 // pred_check_branch
      %23 = sbr.rel (0) target = $region9
    $region8: #{tpu_custom_call.1} parent=1 // pred_region
      %s25 = ssub.s32 8192, 8192
      %26 = vsyncadd [#allocation6], %s25
      %s27 = sshll.u32 [#allocation5], 4
      %s28 = int_to_ptr.vmem [resolvable:$true] %s27
      %33 = dma.hbm_to_vmem [thread:$0]  %s1, 8192, %s28, [#allocation6], 64, 64, 4
    $region9: #{tpu_custom_call.1} parent=1 // pred_fallthru
      _
    // Predicated region
    $region10: #{tpu_custom_call.1} parent=1 // pred_check
      _
    $region11: #{tpu_custom_call.1} parent=1 // pred_check_branch
      %35 = sbr.rel (0) target = $region13
    $region12: #{tpu_custom_call.1} parent=1 // pred_region
      _
    $region13: #{tpu_custom_call.1} parent=1 // pred_fallthru
      _
    // Predicated region
    $region14: #{tpu_custom_call.1} parent=1 // pred_check
      _
    $region15: #{tpu_custom_call.1} parent=1 // pred_check_branch
      %37 = sbr.rel (0) target = $region17
    $region16: #{tpu_custom_call.1} parent=1 // pred_region
      _
    $region17: #{tpu_custom_call.1} parent=1 // pred_fallthru
      _
    // Predicated region
    $region18: #{tpu_custom_call.1} parent=1 // pred_check
      _
    $region19: #{tpu_custom_call.1} parent=1 // pred_check_branch
      %39 = sbr.rel (0) target = $region21
    $region20: #{tpu_custom_call.1} parent=1 // pred_region
      %40 = dma.done [#allocation3], 1024
    $region21: #{tpu_custom_call.1} parent=1 // pred_fallthru
      _
    // Predicated region
    $region22: #{tpu_custom_call.1} parent=1 // pred_check
      _
    $region23: #{tpu_custom_call.1} parent=1 // pred_check_branch
      %42 = sbr.rel (0) target = $region25
    $region24: #{tpu_custom_call.1} parent=1 // pred_region
      %43 = dma.done [#allocation6], 8192
    $region25: #{tpu_custom_call.1} parent=1 // pred_fallthru
      _
    %v45 = vld [vmem:[#allocation2] sm:$0xff]
    %v46 = vld [vmem:[#allocation2 + $0x8] sm:$0xff]
    %v47 = vld [vmem:[#allocation2 + $0x10] sm:$0xff]
    %v48 = vld [vmem:[#allocation2 + $0x18] sm:$0xff]
    %v49 = vld [vmem:[#allocation2 + $0x20] sm:$0xff]
    %v50 = vld [vmem:[#allocation2 + $0x28] sm:$0xff]
    %v51 = vld [vmem:[#allocation2 + $0x30] sm:$0xff]
    %v52 = vld [vmem:[#allocation2 + $0x38] sm:$0xff]
    %v53 = vpack.c.bf16 %v45, %v45
    %v54 = vpack.c.bf16 %v46, %v46
    %v55 = vpack.c.bf16 %v47, %v47
    %v56 = vpack.c.bf16 %v48, %v48
    %v57 = vpack.c.bf16 %v49, %v49
    %v58 = vpack.c.bf16 %v50, %v50
    %v59 = vpack.c.bf16 %v51, %v51
    %v60 = vpack.c.bf16 %v52, %v52
    %v61 = vld [vmem:[%s3] sm:$0x1]
    %v62 = vadd.f32 %v45, %v46
    %63 = vadd.xlane.f32.xlu0 %v62
    %v64 = vpop.xlane.xlu0 %63
    %v65 = vmul.f32 %v45, %v45
    %v66 = vmul.f32 %v46, %v46
    %v67 = vadd.f32 %v65, %v66
    %68 = vadd.xlane.f32.xlu0 %v67
    %v69 = vpop.xlane.xlu0 %68
    %v70 = vmul.f32 %v64, 0.00390625
    %v71 = vmul.f32 %v69, 0.00390625
    %v72 = vmul.f32 %v70, %v70
    %v73 = vsub.f32 %v71, %v72
    %v74 = vmax.f32 %v73, 0.0
    %v75 = vadd.f32 %v74, 1e-05
    %v76 = vrsqrt.pop %v75
    %v77 = vld [vmem:[#allocation5] sm:$0xf]
    %v78 = vld [vmem:[#allocation5 + $0x4] sm:$0xf]
    %v79 = vld [vmem:[#allocation5 + $0x8] sm:$0xf]
    %v80 = vld [vmem:[#allocation5 + $0xc] sm:$0xf]
    %v81 = vld [vmem:[#allocation5 + $0x10] sm:$0xf]
    %v82 = vld [vmem:[#allocation5 + $0x14] sm:$0xf]
    %v83 = vld [vmem:[#allocation5 + $0x18] sm:$0xf]
    %v84 = vld [vmem:[#allocation5 + $0x1c] sm:$0xf]
    %v85 = vld [vmem:[#allocation5 + $0x20] sm:$0xf]
    %v86 = vld [vmem:[#allocation5 + $0x24] sm:$0xf]
    %v87 = vld [vmem:[#allocation5 + $0x28] sm:$0xf]
    %v88 = vld [vmem:[#allocation5 + $0x2c] sm:$0xf]
    %v89 = vld [vmem:[#allocation5 + $0x30] sm:$0xf]
    %v90 = vld [vmem:[#allocation5 + $0x34] sm:$0xf]
    %v91 = vld [vmem:[#allocation5 + $0x38] sm:$0xf]
    %v92 = vld [vmem:[#allocation5 + $0x3c] sm:$0xf]
    %v93 = vld [vmem:[#allocation5 + $0x40] sm:$0xf]
    %v94 = vld [vmem:[#allocation5 + $0x44] sm:$0xf]
    %v95 = vld [vmem:[#allocation5 + $0x48] sm:$0xf]
    %v96 = vld [vmem:[#allocation5 + $0x4c] sm:$0xf]
    %v97 = vld [vmem:[#allocation5 + $0x50] sm:$0xf]
    %v98 = vld [vmem:[#allocation5 + $0x54] sm:$0xf]
    %v99 = vld [vmem:[#allocation5 + $0x58] sm:$0xf]
    %v100 = vld [vmem:[#allocation5 + $0x5c] sm:$0xf]
    %v101 = vld [vmem:[#allocation5 + $0x60] sm:$0xf]
    %v102 = vld [vmem:[#allocation5 + $0x64] sm:$0xf]
    %v103 = vld [vmem:[#allocation5 + $0x68] sm:$0xf]
    %v104 = vld [vmem:[#allocation5 + $0x6c] sm:$0xf]
    %v105 = vld [vmem:[#allocation5 + $0x70] sm:$0xf]
    %v106 = vld [vmem:[#allocation5 + $0x74] sm:$0xf]
    %v107 = vld [vmem:[#allocation5 + $0x78] sm:$0xf]
    %v108 = vld [vmem:[#allocation5 + $0x7c] sm:$0xf]
    %v141 = vunpack.c.l.b16 %v77
    %v142 = vunpack.c.l.b16 %v78
    %v143 = vunpack.c.l.b16 %v79
    %v144 = vunpack.c.l.b16 %v80
    %v145 = vunpack.c.l.b16 %v81
    %v146 = vunpack.c.l.b16 %v82
    %v147 = vunpack.c.l.b16 %v83
    %v148 = vunpack.c.l.b16 %v84
    %v149 = vunpack.c.l.b16 %v85
    %v150 = vunpack.c.l.b16 %v86
    %v151 = vunpack.c.l.b16 %v87
    %v152 = vunpack.c.l.b16 %v88
    %v153 = vunpack.c.l.b16 %v89
    %v154 = vunpack.c.l.b16 %v90
    %v155 = vunpack.c.l.b16 %v91
    %v156 = vunpack.c.l.b16 %v92
    %v157 = vunpack.c.l.b16 %v93
    %v158 = vunpack.c.l.b16 %v94
    %v159 = vunpack.c.l.b16 %v95
    %v160 = vunpack.c.l.b16 %v96
    %v161 = vunpack.c.l.b16 %v97
    %v162 = vunpack.c.l.b16 %v98
    %v163 = vunpack.c.l.b16 %v99
    %v164 = vunpack.c.l.b16 %v100
    %v165 = vunpack.c.l.b16 %v101
    %v166 = vunpack.c.l.b16 %v102
    %v167 = vunpack.c.l.b16 %v103
    %v168 = vunpack.c.l.b16 %v104
    %v169 = vunpack.c.l.b16 %v105
    %v170 = vunpack.c.l.b16 %v106
    %v171 = vunpack.c.l.b16 %v107
    %v172 = vunpack.c.l.b16 %v108
    %v173 = vpack.c.b16 %v142, %v141
    %v174 = vpack.c.b16 %v144, %v143
    %v175 = vpack.c.b16 %v146, %v145
    %v176 = vpack.c.b16 %v148, %v147
    %v177 = vpack.c.b16 %v150, %v149
    %v178 = vpack.c.b16 %v152, %v151
    %v179 = vpack.c.b16 %v154, %v153
    %v180 = vpack.c.b16 %v156, %v155
    %v181 = vpack.c.b16 %v158, %v157
    %v182 = vpack.c.b16 %v160, %v159
    %v183 = vpack.c.b16 %v162, %v161
    %v184 = vpack.c.b16 %v164, %v163
    %v185 = vpack.c.b16 %v166, %v165
    %v186 = vpack.c.b16 %v168, %v167
    %v187 = vpack.c.b16 %v170, %v169
    %v188 = vpack.c.b16 %v172, %v171
    %205 = vmatprep.subr.bf16.mxu0 0
    %206 = vmatpush1.bf16.msra.mxu0 %v173
    %207 = vmatprep.subr.bf16.mxu0 0
    %208 = vmatpush1.bf16.msra.mxu0 %v174
    %209 = vmatprep.subr.bf16.mxu0 0
    %210 = vmatpush1.bf16.msra.mxu0 %v175
    %211 = vmatprep.subr.bf16.mxu0 0
    %212 = vmatpush1.bf16.msra.mxu0 %v176
    %213 = vmatprep.subr.bf16.mxu0 0
    %214 = vmatpush1.bf16.msra.mxu0 %v177
    %215 = vmatprep.subr.bf16.mxu0 0
    %216 = vmatpush1.bf16.msra.mxu0 %v178
    %217 = vmatprep.subr.bf16.mxu0 0
    %218 = vmatpush1.bf16.msra.mxu0 %v179
    %219 = vmatprep.subr.bf16.mxu0 0
    %220 = vmatpush1.bf16.msra.mxu0 %v180
    %221 = vmatprep.subr.bf16.mxu0 0
    %222 = vmatpush1.bf16.msra.mxu0 %v181
    %223 = vmatprep.subr.bf16.mxu0 0
    %224 = vmatpush1.bf16.msra.mxu0 %v182
    %225 = vmatprep.subr.bf16.mxu0 0
    %226 = vmatpush1.bf16.msra.mxu0 %v183
    %227 = vmatprep.subr.bf16.mxu0 0
    %228 = vmatpush1.bf16.msra.mxu0 %v184
    %229 = vmatprep.subr.bf16.mxu0 0
    %230 = vmatpush1.bf16.msra.mxu0 %v185
    %231 = vmatprep.subr.bf16.mxu0 0
    %232 = vmatpush1.bf16.msra.mxu0 %v186
    %233 = vmatprep.subr.bf16.mxu0 0
    %234 = vmatpush1.bf16.msra.mxu0 %v187
    %235 = vmatprep.subr.bf16.mxu0 0
    %236 = vmatpush1.bf16.msra.mxu0 %v188
    %237 = vmatprep.mubr.bf16.mxu0 %v54
    %238 = vmatmul.mubr.bf16.gmra.mrb[0].mxu0 %v53
    %v239 = vpop.f32.mrb[0].mxu0
    %v240 = vadd.f32 0.0, %v239
    %v241 = vpop.f32.mrb[0].mxu0
    %v242 = vpop.f32.mrb[0].mxu0
    %v243 = vpop.f32.mrb[0].mxu0
    %244 = vdwg.mxu0
    %v245 = vmul.f32 %v76, %v240
    %v247 = vlaneseq
    %v248 = vshrl.u32 %v247, 7
    %v249 = vsub.s32 0, %v248
    %v250 = vrot.slane %v61, %v249
    %v252 = vadd.f32 %v250, %v245
    %v253 = vmul.f32 %v76, %v70
    %v254 = vld [vmem:[%s2] sm:$0x1]
    %v255 = vlaneseq
    %v256 = vshrl.u32 %v255, 7
    %v257 = vsub.s32 0, %v256
    %v258 = vrot.slane %v254, %v257
    %v259 = vmul.f32 %v253, %v258
    %v260 = vsub.f32 %v252, %v259
    %v261 = vadd.f32 %v47, %v48
    %262 = vadd.xlane.f32.xlu0 %v261
    %v263 = vpop.xlane.xlu0 %262
    %v264 = vmul.f32 %v47, %v47
    %v265 = vmul.f32 %v48, %v48
    %v266 = vadd.f32 %v264, %v265
    %267 = vadd.xlane.f32.xlu0 %v266
    %v268 = vpop.xlane.xlu0 %267
    %v269 = vmul.f32 %v263, 0.00390625
    %v270 = vmul.f32 %v268, 0.00390625
    %v271 = vmul.f32 %v269, %v269
    %v272 = vsub.f32 %v270, %v271
    %v273 = vmax.f32 %v272, 0.0
    %v274 = vadd.f32 %v273, 1e-05
    %v275 = vrsqrt.pop %v274
    %v276 = vld [vmem:[#allocation5 + $0x80] sm:$0xf]
    %v277 = vld [vmem:[#allocation5 + $0x84] sm:$0xf]
    %v278 = vld [vmem:[#allocation5 + $0x88] sm:$0xf]
    %v279 = vld [vmem:[#allocation5 + $0x8c] sm:$0xf]
    %v280 = vld [vmem:[#allocation5 + $0x90] sm:$0xf]
    %v281 = vld [vmem:[#allocation5 + $0x94] sm:$0xf]
    %v282 = vld [vmem:[#allocation5 + $0x98] sm:$0xf]
    %v283 = vld [vmem:[#allocation5 + $0x9c] sm:$0xf]
    %v284 = vld [vmem:[#allocation5 + $0xa0] sm:$0xf]
    %v285 = vld [vmem:[#allocation5 + $0xa4] sm:$0xf]
    %v286 = vld [vmem:[#allocation5 + $0xa8] sm:$0xf]
    %v287 = vld [vmem:[#allocation5 + $0xac] sm:$0xf]
    %v288 = vld [vmem:[#allocation5 + $0xb0] sm:$0xf]
    %v289 = vld [vmem:[#allocation5 + $0xb4] sm:$0xf]
    %v290 = vld [vmem:[#allocation5 + $0xb8] sm:$0xf]
    %v291 = vld [vmem:[#allocation5 + $0xbc] sm:$0xf]
    %v292 = vld [vmem:[#allocation5 + $0xc0] sm:$0xf]
    %v293 = vld [vmem:[#allocation5 + $0xc4] sm:$0xf]
    %v294 = vld [vmem:[#allocation5 + $0xc8] sm:$0xf]
    %v295 = vld [vmem:[#allocation5 + $0xcc] sm:$0xf]
    %v296 = vld [vmem:[#allocation5 + $0xd0] sm:$0xf]
    %v297 = vld [vmem:[#allocation5 + $0xd4] sm:$0xf]
    %v298 = vld [vmem:[#allocation5 + $0xd8] sm:$0xf]
    %v299 = vld [vmem:[#allocation5 + $0xdc] sm:$0xf]
    %v300 = vld [vmem:[#allocation5 + $0xe0] sm:$0xf]
    %v301 = vld [vmem:[#allocation5 + $0xe4] sm:$0xf]
    %v302 = vld [vmem:[#allocation5 + $0xe8] sm:$0xf]
    %v303 = vld [vmem:[#allocation5 + $0xec] sm:$0xf]
    %v304 = vld [vmem:[#allocation5 + $0xf0] sm:$0xf]
    %v305 = vld [vmem:[#allocation5 + $0xf4] sm:$0xf]
    %v306 = vld [vmem:[#allocation5 + $0xf8] sm:$0xf]
    %v307 = vld [vmem:[#allocation5 + $0xfc] sm:$0xf]
    %v340 = vunpack.c.l.b16 %v276
    %v341 = vunpack.c.l.b16 %v277
    %v342 = vunpack.c.l.b16 %v278
    %v343 = vunpack.c.l.b16 %v279
    %v344 = vunpack.c.l.b16 %v280
    %v345 = vunpack.c.l.b16 %v281
    %v346 = vunpack.c.l.b16 %v282
    %v347 = vunpack.c.l.b16 %v283
    %v348 = vunpack.c.l.b16 %v284
    %v349 = vunpack.c.l.b16 %v285
    %v350 = vunpack.c.l.b16 %v286
    %v351 = vunpack.c.l.b16 %v287
    %v352 = vunpack.c.l.b16 %v288
    %v353 = vunpack.c.l.b16 %v289
    %v354 = vunpack.c.l.b16 %v290
    %v355 = vunpack.c.l.b16 %v291
    %v356 = vunpack.c.l.b16 %v292
    %v357 = vunpack.c.l.b16 %v293
    %v358 = vunpack.c.l.b16 %v294
    %v359 = vunpack.c.l.b16 %v295
    %v360 = vunpack.c.l.b16 %v296
    %v361 = vunpack.c.l.b16 %v297
    %v362 = vunpack.c.l.b16 %v298
    %v363 = vunpack.c.l.b16 %v299
    %v364 = vunpack.c.l.b16 %v300
    %v365 = vunpack.c.l.b16 %v301
    %v366 = vunpack.c.l.b16 %v302
    %v367 = vunpack.c.l.b16 %v303
    %v368 = vunpack.c.l.b16 %v304
    %v369 = vunpack.c.l.b16 %v305
    %v370 = vunpack.c.l.b16 %v306
    %v371 = vunpack.c.l.b16 %v307
    %v372 = vpack.c.b16 %v341, %v340
    %v373 = vpack.c.b16 %v343, %v342
    %v374 = vpack.c.b16 %v345, %v344
    %v375 = vpack.c.b16 %v347, %v346
    %v376 = vpack.c.b16 %v349, %v348
    %v377 = vpack.c.b16 %v351, %v350
    %v378 = vpack.c.b16 %v353, %v352
    %v379 = vpack.c.b16 %v355, %v354
    %v380 = vpack.c.b16 %v357, %v356
    %v381 = vpack.c.b16 %v359, %v358
    %v382 = vpack.c.b16 %v361, %v360
    %v383 = vpack.c.b16 %v363, %v362
    %v384 = vpack.c.b16 %v365, %v364
    %v385 = vpack.c.b16 %v367, %v366
    %v386 = vpack.c.b16 %v369, %v368
    %v387 = vpack.c.b16 %v371, %v370
    %404 = vmatprep.subr.bf16.mxu0 0
    %405 = vmatpush1.bf16.msra.mxu0 %v372
    %406 = vmatprep.subr.bf16.mxu0 0
    %407 = vmatpush1.bf16.msra.mxu0 %v373
    %408 = vmatprep.subr.bf16.mxu0 0
    %409 = vmatpush1.bf16.msra.mxu0 %v374
    %410 = vmatprep.subr.bf16.mxu0 0
    %411 = vmatpush1.bf16.msra.mxu0 %v375
    %412 = vmatprep.subr.bf16.mxu0 0
    %413 = vmatpush1.bf16.msra.mxu0 %v376
    %414 = vmatprep.subr.bf16.mxu0 0
    %415 = vmatpush1.bf16.msra.mxu0 %v377
    %416 = vmatprep.subr.bf16.mxu0 0
    %417 = vmatpush1.bf16.msra.mxu0 %v378
    %418 = vmatprep.subr.bf16.mxu0 0
    %419 = vmatpush1.bf16.msra.mxu0 %v379
    %420 = vmatprep.subr.bf16.mxu0 0
    %421 = vmatpush1.bf16.msra.mxu0 %v380
    %422 = vmatprep.subr.bf16.mxu0 0
    %423 = vmatpush1.bf16.msra.mxu0 %v381
    %424 = vmatprep.subr.bf16.mxu0 0
    %425 = vmatpush1.bf16.msra.mxu0 %v382
    %426 = vmatprep.subr.bf16.mxu0 0
    %427 = vmatpush1.bf16.msra.mxu0 %v383
    %428 = vmatprep.subr.bf16.mxu0 0
    %429 = vmatpush1.bf16.msra.mxu0 %v384
    %430 = vmatprep.subr.bf16.mxu0 0
    %431 = vmatpush1.bf16.msra.mxu0 %v385
    %432 = vmatprep.subr.bf16.mxu0 0
    %433 = vmatpush1.bf16.msra.mxu0 %v386
    %434 = vmatprep.subr.bf16.mxu0 0
    %435 = vmatpush1.bf16.msra.mxu0 %v387
    %436 = vmatprep.mubr.bf16.mxu0 %v56
    %437 = vmatmul.mubr.bf16.gmra.mrb[0].mxu0 %v55
    %v438 = vpop.f32.mrb[0].mxu0
    %v439 = vadd.f32 0.0, %v438
    %v440 = vpop.f32.mrb[0].mxu0
    %v441 = vpop.f32.mrb[0].mxu0
    %v442 = vpop.f32.mrb[0].mxu0
    %443 = vdwg.mxu0
    %v444 = vmul.f32 %v275, %v439
    %v445 = vadd.f32 %v260, %v444
    %v446 = vmul.f32 %v275, %v269
    %v447 = vld [vmem:[%s2 + $0x1] sm:$0x1]
    %v448 = vlaneseq
    %v449 = vshrl.u32 %v448, 7
    %v450 = vsub.s32 0, %v449
    %v451 = vrot.slane %v447, %v450
    %v452 = vmul.f32 %v446, %v451
    %v453 = vsub.f32 %v445, %v452
    %v454 = vadd.f32 %v49, %v50
    %455 = vadd.xlane.f32.xlu0 %v454
    %v456 = vpop.xlane.xlu0 %455
    %v457 = vmul.f32 %v49, %v49
    %v458 = vmul.f32 %v50, %v50
    %v459 = vadd.f32 %v457, %v458
    %460 = vadd.xlane.f32.xlu0 %v459
    %v461 = vpop.xlane.xlu0 %460
    %v462 = vmul.f32 %v456, 0.00390625
    %v463 = vmul.f32 %v461, 0.00390625
    %v464 = vmul.f32 %v462, %v462
    %v465 = vsub.f32 %v463, %v464
    %v466 = vmax.f32 %v465, 0.0
    %v467 = vadd.f32 %v466, 1e-05
    %v468 = vrsqrt.pop %v467
    %v469 = vld [vmem:[#allocation5 + $0x100] sm:$0xf]
    %v470 = vld [vmem:[#allocation5 + $0x104] sm:$0xf]
    %v471 = vld [vmem:[#allocation5 + $0x108] sm:$0xf]
    %v472 = vld [vmem:[#allocation5 + $0x10c] sm:$0xf]
    %v473 = vld [vmem:[#allocation5 + $0x110] sm:$0xf]
    %v474 = vld [vmem:[#allocation5 + $0x114] sm:$0xf]
    %v475 = vld [vmem:[#allocation5 + $0x118] sm:$0xf]
    %v476 = vld [vmem:[#allocation5 + $0x11c] sm:$0xf]
    %v477 = vld [vmem:[#allocation5 + $0x120] sm:$0xf]
    %v478 = vld [vmem:[#allocation5 + $0x124] sm:$0xf]
    %v479 = vld [vmem:[#allocation5 + $0x128] sm:$0xf]
    %v480 = vld [vmem:[#allocation5 + $0x12c] sm:$0xf]
    %v481 = vld [vmem:[#allocation5 + $0x130] sm:$0xf]
    %v482 = vld [vmem:[#allocation5 + $0x134] sm:$0xf]
    %v483 = vld [vmem:[#allocation5 + $0x138] sm:$0xf]
    %v484 = vld [vmem:[#allocation5 + $0x13c] sm:$0xf]
    %v485 = vld [vmem:[#allocation5 + $0x140] sm:$0xf]
    %v486 = vld [vmem:[#allocation5 + $0x144] sm:$0xf]
    %v487 = vld [vmem:[#allocation5 + $0x148] sm:$0xf]
    %v488 = vld [vmem:[#allocation5 + $0x14c] sm:$0xf]
    %v489 = vld [vmem:[#allocation5 + $0x150] sm:$0xf]
    %v490 = vld [vmem:[#allocation5 + $0x154] sm:$0xf]
    %v491 = vld [vmem:[#allocation5 + $0x158] sm:$0xf]
    %v492 = vld [vmem:[#allocation5 + $0x15c] sm:$0xf]
    %v493 = vld [vmem:[#allocation5 + $0x160] sm:$0xf]
    %v494 = vld [vmem:[#allocation5 + $0x164] sm:$0xf]
    %v495 = vld [vmem:[#allocation5 + $0x168] sm:$0xf]
    %v496 = vld [vmem:[#allocation5 + $0x16c] sm:$0xf]
    %v497 = vld [vmem:[#allocation5 + $0x170] sm:$0xf]
    %v498 = vld [vmem:[#allocation5 + $0x174] sm:$0xf]
    %v499 = vld [vmem:[#allocation5 + $0x178] sm:$0xf]
    %v500 = vld [vmem:[#allocation5 + $0x17c] sm:$0xf]
    %v533 = vunpack.c.l.b16 %v469
    %v534 = vunpack.c.l.b16 %v470
    %v535 = vunpack.c.l.b16 %v471
    %v536 = vunpack.c.l.b16 %v472
    %v537 = vunpack.c.l.b16 %v473
    %v538 = vunpack.c.l.b16 %v474
    %v539 = vunpack.c.l.b16 %v475
    %v540 = vunpack.c.l.b16 %v476
    %v541 = vunpack.c.l.b16 %v477
    %v542 = vunpack.c.l.b16 %v478
    %v543 = vunpack.c.l.b16 %v479
    %v544 = vunpack.c.l.b16 %v480
    %v545 = vunpack.c.l.b16 %v481
    %v546 = vunpack.c.l.b16 %v482
    %v547 = vunpack.c.l.b16 %v483
    %v548 = vunpack.c.l.b16 %v484
    %v549 = vunpack.c.l.b16 %v485
    %v550 = vunpack.c.l.b16 %v486
    %v551 = vunpack.c.l.b16 %v487
    %v552 = vunpack.c.l.b16 %v488
    %v553 = vunpack.c.l.b16 %v489
    %v554 = vunpack.c.l.b16 %v490
    %v555 = vunpack.c.l.b16 %v491
    %v556 = vunpack.c.l.b16 %v492
    %v557 = vunpack.c.l.b16 %v493
    %v558 = vunpack.c.l.b16 %v494
    %v559 = vunpack.c.l.b16 %v495
    %v560 = vunpack.c.l.b16 %v496
    %v561 = vunpack.c.l.b16 %v497
    %v562 = vunpack.c.l.b16 %v498
    %v563 = vunpack.c.l.b16 %v499
    %v564 = vunpack.c.l.b16 %v500
    %v565 = vpack.c.b16 %v534, %v533
    %v566 = vpack.c.b16 %v536, %v535
    %v567 = vpack.c.b16 %v538, %v537
    %v568 = vpack.c.b16 %v540, %v539
    %v569 = vpack.c.b16 %v542, %v541
    %v570 = vpack.c.b16 %v544, %v543
    %v571 = vpack.c.b16 %v546, %v545
    %v572 = vpack.c.b16 %v548, %v547
    %v573 = vpack.c.b16 %v550, %v549
    %v574 = vpack.c.b16 %v552, %v551
    %v575 = vpack.c.b16 %v554, %v553
    %v576 = vpack.c.b16 %v556, %v555
    %v577 = vpack.c.b16 %v558, %v557
    %v578 = vpack.c.b16 %v560, %v559
    %v579 = vpack.c.b16 %v562, %v561
    %v580 = vpack.c.b16 %v564, %v563
    %597 = vmatprep.subr.bf16.mxu0 0
    %598 = vmatpush1.bf16.msra.mxu0 %v565
    %599 = vmatprep.subr.bf16.mxu0 0
    %600 = vmatpush1.bf16.msra.mxu0 %v566
    %601 = vmatprep.subr.bf16.mxu0 0
    %602 = vmatpush1.bf16.msra.mxu0 %v567
    %603 = vmatprep.subr.bf16.mxu0 0
    %604 = vmatpush1.bf16.msra.mxu0 %v568
    %605 = vmatprep.subr.bf16.mxu0 0
    %606 = vmatpush1.bf16.msra.mxu0 %v569
    %607 = vmatprep.subr.bf16.mxu0 0
    %608 = vmatpush1.bf16.msra.mxu0 %v570
    %609 = vmatprep.subr.bf16.mxu0 0
    %610 = vmatpush1.bf16.msra.mxu0 %v571
    %611 = vmatprep.subr.bf16.mxu0 0
    %612 = vmatpush1.bf16.msra.mxu0 %v572
    %613 = vmatprep.subr.bf16.mxu0 0
    %614 = vmatpush1.bf16.msra.mxu0 %v573
    %615 = vmatprep.subr.bf16.mxu0 0
    %616 = vmatpush1.bf16.msra.mxu0 %v574
    %617 = vmatprep.subr.bf16.mxu0 0
    %618 = vmatpush1.bf16.msra.mxu0 %v575
    %619 = vmatprep.subr.bf16.mxu0 0
    %620 = vmatpush1.bf16.msra.mxu0 %v576
    %621 = vmatprep.subr.bf16.mxu0 0
    %622 = vmatpush1.bf16.msra.mxu0 %v577
    %623 = vmatprep.subr.bf16.mxu0 0
    %624 = vmatpush1.bf16.msra.mxu0 %v578
    %625 = vmatprep.subr.bf16.mxu0 0
    %626 = vmatpush1.bf16.msra.mxu0 %v579
    %627 = vmatprep.subr.bf16.mxu0 0
    %628 = vmatpush1.bf16.msra.mxu0 %v580
    %629 = vmatprep.mubr.bf16.mxu0 %v58
    %630 = vmatmul.mubr.bf16.gmra.mrb[0].mxu0 %v57
    %v631 = vpop.f32.mrb[0].mxu0
    %v632 = vadd.f32 0.0, %v631
    %v633 = vpop.f32.mrb[0].mxu0
    %v634 = vpop.f32.mrb[0].mxu0
    %v635 = vpop.f32.mrb[0].mxu0
    %636 = vdwg.mxu0
    %v637 = vmul.f32 %v468, %v632
    %v638 = vadd.f32 %v453, %v637
    %v639 = vmul.f32 %v468, %v462
    %v640 = vld [vmem:[%s2 + $0x2] sm:$0x1]
    %v641 = vlaneseq
    %v642 = vshrl.u32 %v641, 7
    %v643 = vsub.s32 0, %v642
    %v644 = vrot.slane %v640, %v643
    %v645 = vmul.f32 %v639, %v644
    %v646 = vsub.f32 %v638, %v645
    %v647 = vadd.f32 %v51, %v52
    %648 = vadd.xlane.f32.xlu0 %v647
    %v649 = vpop.xlane.xlu0 %648
    %v650 = vmul.f32 %v51, %v51
    %v651 = vmul.f32 %v52, %v52
    %v652 = vadd.f32 %v650, %v651
    %653 = vadd.xlane.f32.xlu0 %v652
    %v654 = vpop.xlane.xlu0 %653
    %v655 = vmul.f32 %v649, 0.00390625
    %v656 = vmul.f32 %v654, 0.00390625
    %v657 = vmul.f32 %v655, %v655
    %v658 = vsub.f32 %v656, %v657
    %v659 = vmax.f32 %v658, 0.0
    %v660 = vadd.f32 %v659, 1e-05
    %v661 = vrsqrt.pop %v660
    %v662 = vld [vmem:[#allocation5 + $0x180] sm:$0xf]
    %v663 = vld [vmem:[#allocation5 + $0x184] sm:$0xf]
    %v664 = vld [vmem:[#allocation5 + $0x188] sm:$0xf]
    %v665 = vld [vmem:[#allocation5 + $0x18c] sm:$0xf]
    %v666 = vld [vmem:[#allocation5 + $0x190] sm:$0xf]
    %v667 = vld [vmem:[#allocation5 + $0x194] sm:$0xf]
    %v668 = vld [vmem:[#allocation5 + $0x198] sm:$0xf]
    %v669 = vld [vmem:[#allocation5 + $0x19c] sm:$0xf]
    %v670 = vld [vmem:[#allocation5 + $0x1a0] sm:$0xf]
    %v671 = vld [vmem:[#allocation5 + $0x1a4] sm:$0xf]
    %v672 = vld [vmem:[#allocation5 + $0x1a8] sm:$0xf]
    %v673 = vld [vmem:[#allocation5 + $0x1ac] sm:$0xf]
    %v674 = vld [vmem:[#allocation5 + $0x1b0] sm:$0xf]
    %v675 = vld [vmem:[#allocation5 + $0x1b4] sm:$0xf]
    %v676 = vld [vmem:[#allocation5 + $0x1b8] sm:$0xf]
    %v677 = vld [vmem:[#allocation5 + $0x1bc] sm:$0xf]
    %v678 = vld [vmem:[#allocation5 + $0x1c0] sm:$0xf]
    %v679 = vld [vmem:[#allocation5 + $0x1c4] sm:$0xf]
    %v680 = vld [vmem:[#allocation5 + $0x1c8] sm:$0xf]
    %v681 = vld [vmem:[#allocation5 + $0x1cc] sm:$0xf]
    %v682 = vld [vmem:[#allocation5 + $0x1d0] sm:$0xf]
    %v683 = vld [vmem:[#allocation5 + $0x1d4] sm:$0xf]
    %v684 = vld [vmem:[#allocation5 + $0x1d8] sm:$0xf]
    %v685 = vld [vmem:[#allocation5 + $0x1dc] sm:$0xf]
    %v686 = vld [vmem:[#allocation5 + $0x1e0] sm:$0xf]
    %v687 = vld [vmem:[#allocation5 + $0x1e4] sm:$0xf]
    %v688 = vld [vmem:[#allocation5 + $0x1e8] sm:$0xf]
    %v689 = vld [vmem:[#allocation5 + $0x1ec] sm:$0xf]
    %v690 = vld [vmem:[#allocation5 + $0x1f0] sm:$0xf]
    %v691 = vld [vmem:[#allocation5 + $0x1f4] sm:$0xf]
    %v692 = vld [vmem:[#allocation5 + $0x1f8] sm:$0xf]
    %v693 = vld [vmem:[#allocation5 + $0x1fc] sm:$0xf]
    %v726 = vunpack.c.l.b16 %v662
    %v727 = vunpack.c.l.b16 %v663
    %v728 = vunpack.c.l.b16 %v664
    %v729 = vunpack.c.l.b16 %v665
    %v730 = vunpack.c.l.b16 %v666
    %v731 = vunpack.c.l.b16 %v667
    %v732 = vunpack.c.l.b16 %v668
    %v733 = vunpack.c.l.b16 %v669
    %v734 = vunpack.c.l.b16 %v670
    %v735 = vunpack.c.l.b16 %v671
    %v736 = vunpack.c.l.b16 %v672
    %v737 = vunpack.c.l.b16 %v673
    %v738 = vunpack.c.l.b16 %v674
    %v739 = vunpack.c.l.b16 %v675
    %v740 = vunpack.c.l.b16 %v676
    %v741 = vunpack.c.l.b16 %v677
    %v742 = vunpack.c.l.b16 %v678
    %v743 = vunpack.c.l.b16 %v679
    %v744 = vunpack.c.l.b16 %v680
    %v745 = vunpack.c.l.b16 %v681
    %v746 = vunpack.c.l.b16 %v682
    %v747 = vunpack.c.l.b16 %v683
    %v748 = vunpack.c.l.b16 %v684
    %v749 = vunpack.c.l.b16 %v685
    %v750 = vunpack.c.l.b16 %v686
    %v751 = vunpack.c.l.b16 %v687
    %v752 = vunpack.c.l.b16 %v688
    %v753 = vunpack.c.l.b16 %v689
    %v754 = vunpack.c.l.b16 %v690
    %v755 = vunpack.c.l.b16 %v691
    %v756 = vunpack.c.l.b16 %v692
    %v757 = vunpack.c.l.b16 %v693
    %v758 = vpack.c.b16 %v727, %v726
    %v759 = vpack.c.b16 %v729, %v728
    %v760 = vpack.c.b16 %v731, %v730
    %v761 = vpack.c.b16 %v733, %v732
    %v762 = vpack.c.b16 %v735, %v734
    %v763 = vpack.c.b16 %v737, %v736
    %v764 = vpack.c.b16 %v739, %v738
    %v765 = vpack.c.b16 %v741, %v740
    %v766 = vpack.c.b16 %v743, %v742
    %v767 = vpack.c.b16 %v745, %v744
    %v768 = vpack.c.b16 %v747, %v746
    %v769 = vpack.c.b16 %v749, %v748
    %v770 = vpack.c.b16 %v751, %v750
    %v771 = vpack.c.b16 %v753, %v752
    %v772 = vpack.c.b16 %v755, %v754
    %v773 = vpack.c.b16 %v757, %v756
    %790 = vmatprep.subr.bf16.mxu0 0
    %791 = vmatpush1.bf16.msra.mxu0 %v758
    %792 = vmatprep.subr.bf16.mxu0 0
    %793 = vmatpush1.bf16.msra.mxu0 %v759
    %794 = vmatprep.subr.bf16.mxu0 0
    %795 = vmatpush1.bf16.msra.mxu0 %v760
    %796 = vmatprep.subr.bf16.mxu0 0
    %797 = vmatpush1.bf16.msra.mxu0 %v761
    %798 = vmatprep.subr.bf16.mxu0 0
    %799 = vmatpush1.bf16.msra.mxu0 %v762
    %800 = vmatprep.subr.bf16.mxu0 0
    %801 = vmatpush1.bf16.msra.mxu0 %v763
    %802 = vmatprep.subr.bf16.mxu0 0
    %803 = vmatpush1.bf16.msra.mxu0 %v764
    %804 = vmatprep.subr.bf16.mxu0 0
    %805 = vmatpush1.bf16.msra.mxu0 %v765
    %806 = vmatprep.subr.bf16.mxu0 0
    %807 = vmatpush1.bf16.msra.mxu0 %v766
    %808 = vmatprep.subr.bf16.mxu0 0
    %809 = vmatpush1.bf16.msra.mxu0 %v767
    %810 = vmatprep.subr.bf16.mxu0 0
    %811 = vmatpush1.bf16.msra.mxu0 %v768
    %812 = vmatprep.subr.bf16.mxu0 0
    %813 = vmatpush1.bf16.msra.mxu0 %v769
    %814 = vmatprep.subr.bf16.mxu0 0
    %815 = vmatpush1.bf16.msra.mxu0 %v770
    %816 = vmatprep.subr.bf16.mxu0 0
    %817 = vmatpush1.bf16.msra.mxu0 %v771
    %818 = vmatprep.subr.bf16.mxu0 0
    %819 = vmatpush1.bf16.msra.mxu0 %v772
    %820 = vmatprep.subr.bf16.mxu0 0
    %821 = vmatpush1.bf16.msra.mxu0 %v773
    %822 = vmatprep.mubr.bf16.mxu0 %v60
    %823 = vmatmul.mubr.bf16.gmra.mrb[0].mxu0 %v59
    %v824 = vpop.f32.mrb[0].mxu0
    %v825 = vadd.f32 0.0, %v824
    %v826 = vpop.f32.mrb[0].mxu0
    %v827 = vpop.f32.mrb[0].mxu0
    %v828 = vpop.f32.mrb[0].mxu0
    %829 = vdwg.mxu0
    %v830 = vmul.f32 %v661, %v825
    %v831 = vadd.f32 %v646, %v830
    %v832 = vmul.f32 %v661, %v655
    %v833 = vld [vmem:[%s2 + $0x3] sm:$0x1]
    %v834 = vlaneseq
    %v835 = vshrl.u32 %v834, 7
    %v836 = vsub.s32 0, %v835
    %v837 = vrot.slane %v833, %v836
    %v838 = vmul.f32 %v832, %v837
    %v839 = vsub.f32 %v831, %v838
    %840 = vst [vmem:[#allocation7] sm:$0xff] %v839
    // Predicated region
    $region26: #{tpu_custom_call.1} parent=1 // pred_check
      _
    $region27: #{tpu_custom_call.1} parent=1 // pred_check_branch
      %842 = sbr.rel (0) target = $region29
    $region28: #{tpu_custom_call.1} parent=1 // pred_region
      %s844 = ssub.s32 128, 128
      %845 = vsyncadd [#allocation4], %s844
      %s847 = sshll.u32 [#allocation7], 4
      %s848 = int_to_ptr.vmem [resolvable:$true] %s847
      %850 = dma.vmem_to_hbm [thread:$0]  %s848, 128, %s4, [#allocation4]
    $region29: #{tpu_custom_call.1} parent=1 // pred_fallthru
      _
    // Predicated region
    $region30: #{tpu_custom_call.1} parent=1 // pred_check
      _
    $region31: #{tpu_custom_call.1} parent=1 // pred_check_branch
      %852 = sbr.rel (0) target = $region33
    $region32: #{tpu_custom_call.1} parent=1 // pred_region
      %853 = dma.done [#allocation4], 128
    $region33: #{tpu_custom_call.1} parent=1 // pred_fallthru
      _
    %854 = vsyncpa [#allocation3], 1
    %855 = vsyncpa [#allocation6], 1
    %856 = vsyncpa [#allocation4], 1

</llo_original>
